<compile_context>
chip_gen: v7x
topology: tpu7x:2x2x1
jax: 0.10.0
libtpu: 0.0.40
codegen_flags: <defaults>
</compile_context>

<pallas_src>
import functools

import jax
import jax.numpy as jnp
from jax import lax
from jax.experimental import pallas as pl
from jax.experimental.pallas import tpu as pltpu


_EPS = 1e-8  # matches torch.nn.functional.cosine_similarity default eps


def _simsiam_loss_kernel(z1_ref, z2_ref, p1_ref, p2_ref, loss_ref, acc_ref,
                         *, batch, block_rows, needs_mask):
    step = pl.program_id(0)

    @pl.when(step == 0)
    def _init():
        acc_ref[...] = jnp.zeros_like(acc_ref)

    z1 = z1_ref[...].astype(jnp.float32)
    z2 = z2_ref[...].astype(jnp.float32)
    p1 = p1_ref[...].astype(jnp.float32)
    p2 = p2_ref[...].astype(jnp.float32)

    if needs_mask:
        # Only compiled when B % block_rows != 0: mask padded rows of the
        # (possibly out-of-bounds) final tile so they contribute exactly 0.
        row = lax.broadcasted_iota(jnp.int32, (block_rows, 1), 0)
        valid = (row + step * block_rows) < batch
    else:
        valid = None

    def cos_sum(p, z):
        dot = jnp.sum(p * z, axis=-1, keepdims=True)     # (TB, 1)
        ps = jnp.sum(p * p, axis=-1, keepdims=True)      # (TB, 1)
        zs = jnp.sum(z * z, axis=-1, keepdims=True)      # (TB, 1)
        # rsqrt(max(|x|^2, eps^2)) == 1 / max(|x|, eps): torch eps semantics,
        # and rsqrt rides the EUP instead of the VPU divide path.
        inv_p = lax.rsqrt(jnp.maximum(ps, _EPS * _EPS))
        inv_z = lax.rsqrt(jnp.maximum(zs, _EPS * _EPS))
        cos = dot * inv_p * inv_z                        # (TB, 1)
        if valid is not None:
            cos = jnp.where(valid, cos, 0.0)             # select kills NaN/garbage
        return jnp.sum(cos, axis=0, keepdims=True)       # (1, 1)

    acc_ref[...] += cos_sum(p1, z2) + cos_sum(p2, z1)

    @pl.when(step == pl.num_programs(0) - 1)
    def _finalize():
        # 0.5 * (-mean1) + 0.5 * (-mean2) == -(sum1 + sum2) / (2 * B)
        loss_ref[...] = (-0.5 / batch) * acc_ref[...]


def _pick_block_rows(batch, feat, itemsize):
    """Largest row tile s.t. 4 inputs x 2 pipeline buffers fit ~24 MiB VMEM."""
    budget = 24 * 1024 * 1024
    tb = max(8, budget // (8 * feat * itemsize))
    tb = min(tb, 2048)
    if tb >= batch:
        return batch                       # single tile covers the whole batch
    return max(8, (tb // 8) * 8)           # respect the (8, 128) sublane rule


def simsiam_loss(z1, z2, p1, p2, *, block_rows=None):
    assert z1.shape == z2.shape == p1.shape == p2.shape
    assert z1.ndim == 2
    B, D = z1.shape
    itemsize = jnp.dtype(z1.dtype).itemsize
    if block_rows is None:
        block_rows = _pick_block_rows(B, D, itemsize)
    block_rows = min(block_rows, B)
    grid = (pl.cdiv(B, block_rows),)
    needs_mask = (B % block_rows) != 0

    in_spec = pl.BlockSpec((block_rows, D), lambda i: (i, 0))
    out_spec = pl.BlockSpec((1, 1), lambda i: (0, 0))

    kernel = functools.partial(
        _simsiam_loss_kernel,
        batch=B, block_rows=block_rows, needs_mask=needs_mask)

    cost = pl.CostEstimate(
        flops=12 * B * D,                  # 3 fused mul-add reductions x 2 pairs
        transcendentals=4 * B,             # 2 rsqrt per pair per row
        bytes_accessed=4 * B * D * itemsize + 4,
    )

    out = pl.pallas_call(
        kernel,
        out_shape=jax.ShapeDtypeStruct((1, 1), jnp.float32),
        grid_spec=pltpu.PrefetchScalarGridSpec(
            num_scalar_prefetch=0,
            grid=grid,
            in_specs=[in_spec, in_spec, in_spec, in_spec],
            out_specs=out_spec,
            scratch_shapes=[pltpu.VMEM((1, 1), jnp.float32)],
        ),
        compiler_params=pltpu.CompilerParams(
            dimension_semantics=("arbitrary",),   # accumulation axis
            vmem_limit_bytes=32 * 1024 * 1024,    # raise v5e's 16 MiB default
        ),
        cost_estimate=cost,
    )(z1, z2, p1, p2)
    return out[0, 0]


def _reference_loss(z1, z2, p1, p2):
    """Pure-JAX reference replicating torch semantics."""
    def mean_cos(p, z):
        p = p.astype(jnp.float32)
        z = z.astype(jnp.float32)
        dot = jnp.sum(p * z, axis=-1)
        pn = jnp.maximum(jnp.linalg.norm(p, axis=-1), _EPS)
        zn = jnp.maximum(jnp.linalg.norm(z, axis=-1), _EPS)
        return jnp.mean(dot / (pn * zn))
    return 0.5 * (-mean_cos(p1, z2)) + 0.5 * (-mean_cos(p2, z1))


if __name__ == "__main__":
    key = jax.random.PRNGKey(0)

    # Case 1: small SimSiam-style embeddings, single tile (batch=8, dim=32).
    B, D = 8, 32
    k1, k2, k3, k4, key = jax.random.split(key, 5)
    z1 = jax.random.normal(k1, (B, D), dtype=jnp.float32)
    z2 = jax.random.normal(k2, (B, D), dtype=jnp.float32)
    p1 = jax.random.normal(k3, (B, D), dtype=jnp.float32)
    p2 = jax.random.normal(k4, (B, D), dtype=jnp.float32)

    loss = jax.block_until_ready(simsiam_loss(z1, z2, p1, p2))
    ref = jax.block_until_ready(_reference_loss(z1, z2, p1, p2))
    assert jnp.allclose(loss, ref, atol=1e-5, rtol=1e-5), (loss, ref)

    # Case 2: exercise the tiled grid + remainder masking (batch=20, dim=128,
    # forced 8-row tiles -> 3 grid steps, last tile partially masked).
    B2, D2 = 20, 128
    k1, k2, k3, k4, key = jax.random.split(key, 5)
    z1b = jax.random.normal(k1, (B2, D2), dtype=jnp.float32)
    z2b = jax.random.normal(k2, (B2, D2), dtype=jnp.float32)
    p1b = jax.random.normal(k3, (B2, D2), dtype=jnp.float32)
    p2b = jax.random.normal(k4, (B2, D2), dtype=jnp.float32)

    loss2 = jax.block_until_ready(simsiam_loss(z1b, z2b, p1b, p2b, block_rows=8))
    ref2 = jax.block_until_ready(_reference_loss(z1b, z2b, p1b, p2b))
    assert jnp.allclose(loss2, ref2, atol=1e-5, rtol=1e-5), (loss2, ref2)

    # Case 3: bf16 inputs, tiled with an exactly-divisible batch (no masking
    # path compiled), checks the in-kernel f32 upcast.
    B3, D3 = 32, 256
    k1, k2, k3, k4, key = jax.random.split(key, 5)
    z1c = jax.random.normal(k1, (B3, D3), dtype=jnp.bfloat16)
    z2c = jax.random.normal(k2, (B3, D3), dtype=jnp.bfloat16)
    p1c = jax.random.normal(k3, (B3, D3), dtype=jnp.bfloat16)
    p2c = jax.random.normal(k4, (B3, D3), dtype=jnp.bfloat16)

    loss3 = jax.block_until_ready(simsiam_loss(z1c, z2c, p1c, p2c, block_rows=8))
    ref3 = jax.block_until_ready(_reference_loss(z1c, z2c, p1c, p2c))
    assert jnp.allclose(loss3, ref3, atol=1e-2, rtol=1e-2), (loss3, ref3)

    print("KERNEL_OK")
</pallas_src>

<mosaic_0001>
module attributes {stable_mosaic.version = 11 : i64} {
  func.func @_simsiam_loss_kernel(%arg0: i32, %arg1: memref<8x32xf32, #tpu.memory_space<vmem>>, %arg2: memref<8x32xf32, #tpu.memory_space<vmem>>, %arg3: memref<8x32xf32, #tpu.memory_space<vmem>>, %arg4: memref<8x32xf32, #tpu.memory_space<vmem>>, %arg5: memref<1x1xf32, #tpu.memory_space<vmem>>, %arg6: memref<1x1xf32, #tpu.memory_space<vmem>>) attributes {dimension_semantics = [#tpu.dimension_semantics<arbitrary>], iteration_bounds = array<i64: 1>, scalar_prefetch = 0 : i64, scratch_operands = 1 : i64, tpu.core_type = #tpu.core_type<tc>, window_params = [{transform_indices = @transform_0, window_bounds = array<i64: 8, 32>}, {transform_indices = @transform_1, window_bounds = array<i64: 8, 32>}, {transform_indices = @transform_2, window_bounds = array<i64: 8, 32>}, {transform_indices = @transform_3, window_bounds = array<i64: 8, 32>}, {pipeline_mode = #tpu.pipeline_mode<synchronous>, transform_indices = @transform_4, window_bounds = array<i64: 1, 1>}]} {
    %c0_i32 = arith.constant 0 : i32
    %0 = arith.cmpi eq, %arg0, %c0_i32 : i32
    %1 = arith.extui %0 : i1 to i32
    %c0_i32_0 = arith.constant 0 : i32
    %2 = arith.cmpi ne, %1, %c0_i32_0 : i32
    scf.if %2 {
      %cst_25 = arith.constant 0.000000e+00 : f32
      %52 = vector.broadcast %cst_25 : f32 to vector<1x1xf32>
      %c0_26 = arith.constant 0 : index
      %c0_27 = arith.constant 0 : index
      %53 = vector.load %arg6[%c0_26, %c0_27] : memref<1x1xf32, #tpu.memory_space<vmem>>, vector<1x1xf32>
      tpu.vector_store %arg6[%c0_26, %c0_27], %52 {strides = array<i32>} : memref<1x1xf32, #tpu.memory_space<vmem>>, vector<1x1xf32>,
    } else {
    }
    %c0 = arith.constant 0 : index
    %c0_1 = arith.constant 0 : index
    %3 = vector.load %arg1[%c0, %c0_1] : memref<8x32xf32, #tpu.memory_space<vmem>>, vector<8x32xf32>
    %c0_2 = arith.constant 0 : index
    %c0_3 = arith.constant 0 : index
    %4 = vector.load %arg2[%c0_2, %c0_3] : memref<8x32xf32, #tpu.memory_space<vmem>>, vector<8x32xf32>
    %c0_4 = arith.constant 0 : index
    %c0_5 = arith.constant 0 : index
    %5 = vector.load %arg3[%c0_4, %c0_5] : memref<8x32xf32, #tpu.memory_space<vmem>>, vector<8x32xf32>
    %c0_6 = arith.constant 0 : index
    %c0_7 = arith.constant 0 : index
    %6 = vector.load %arg4[%c0_6, %c0_7] : memref<8x32xf32, #tpu.memory_space<vmem>>, vector<8x32xf32>
    %c0_8 = arith.constant 0 : index
    %c0_9 = arith.constant 0 : index
    %7 = vector.load %arg6[%c0_8, %c0_9] : memref<1x1xf32, #tpu.memory_space<vmem>>, vector<1x1xf32>
    %8 = arith.mulf %5, %4 : vector<8x32xf32>
    %cst = arith.constant dense<0.000000e+00> : vector<8xf32>
    %9 = vector.multi_reduction <add>, %8, %cst [1] : vector<8x32xf32> to vector<8xf32>
    %10 = vector.shape_cast %9 : vector<8xf32> to vector<8x1xf32>
    %11 = arith.mulf %5, %5 : vector<8x32xf32>
    %cst_10 = arith.constant dense<0.000000e+00> : vector<8xf32>
    %12 = vector.multi_reduction <add>, %11, %cst_10 [1] : vector<8x32xf32> to vector<8xf32>
    %13 = vector.shape_cast %12 : vector<8xf32> to vector<8x1xf32>
    %14 = arith.mulf %4, %4 : vector<8x32xf32>
    %cst_11 = arith.constant dense<0.000000e+00> : vector<8xf32>
    %15 = vector.multi_reduction <add>, %14, %cst_11 [1] : vector<8x32xf32> to vector<8xf32>
    %16 = vector.shape_cast %15 : vector<8xf32> to vector<8x1xf32>
    %cst_12 = arith.constant 1.000000e-16 : f32
    %17 = vector.broadcast %cst_12 : f32 to vector<8x1xf32>
    %18 = arith.maximumf %13, %17 : vector<8x1xf32>
    %19 = math.rsqrt %18 : vector<8x1xf32>
    %cst_13 = arith.constant 1.000000e-16 : f32
    %20 = vector.broadcast %cst_13 : f32 to vector<8x1xf32>
    %21 = arith.maximumf %16, %20 : vector<8x1xf32>
    %22 = math.rsqrt %21 : vector<8x1xf32>
    %23 = arith.mulf %10, %19 : vector<8x1xf32>
    %24 = arith.mulf %23, %22 : vector<8x1xf32>
    %cst_14 = arith.constant dense<0.000000e+00> : vector<1xf32>
    %25 = vector.multi_reduction <add>, %24, %cst_14 [0] : vector<8x1xf32> to vector<1xf32>
    %26 = vector.shape_cast %25 : vector<1xf32> to vector<1x1xf32>
    %27 = arith.mulf %6, %3 : vector<8x32xf32>
    %cst_15 = arith.constant dense<0.000000e+00> : vector<8xf32>
    %28 = vector.multi_reduction <add>, %27, %cst_15 [1] : vector<8x32xf32> to vector<8xf32>
    %29 = vector.shape_cast %28 : vector<8xf32> to vector<8x1xf32>
    %30 = arith.mulf %6, %6 : vector<8x32xf32>
    %cst_16 = arith.constant dense<0.000000e+00> : vector<8xf32>
    %31 = vector.multi_reduction <add>, %30, %cst_16 [1] : vector<8x32xf32> to vector<8xf32>
    %32 = vector.shape_cast %31 : vector<8xf32> to vector<8x1xf32>
    %33 = arith.mulf %3, %3 : vector<8x32xf32>
    %cst_17 = arith.constant dense<0.000000e+00> : vector<8xf32>
    %34 = vector.multi_reduction <add>, %33, %cst_17 [1] : vector<8x32xf32> to vector<8xf32>
    %35 = vector.shape_cast %34 : vector<8xf32> to vector<8x1xf32>
    %cst_18 = arith.constant 1.000000e-16 : f32
    %36 = vector.broadcast %cst_18 : f32 to vector<8x1xf32>
    %37 = arith.maximumf %32, %36 : vector<8x1xf32>
    %38 = math.rsqrt %37 : vector<8x1xf32>
    %cst_19 = arith.constant 1.000000e-16 : f32
    %39 = vector.broadcast %cst_19 : f32 to vector<8x1xf32>
    %40 = arith.maximumf %35, %39 : vector<8x1xf32>
    %41 = math.rsqrt %40 : vector<8x1xf32>
    %42 = arith.mulf %29, %38 : vector<8x1xf32>
    %43 = arith.mulf %42, %41 : vector<8x1xf32>
    %cst_20 = arith.constant dense<0.000000e+00> : vector<1xf32>
    %44 = vector.multi_reduction <add>, %43, %cst_20 [0] : vector<8x1xf32> to vector<1xf32>
    %45 = vector.shape_cast %44 : vector<1xf32> to vector<1x1xf32>
    %46 = arith.addf %26, %45 : vector<1x1xf32>
    %47 = arith.addf %7, %46 : vector<1x1xf32>
    %c0_21 = arith.constant 0 : index
    %c0_22 = arith.constant 0 : index
    %48 = vector.load %arg6[%c0_21, %c0_22] : memref<1x1xf32, #tpu.memory_space<vmem>>, vector<1x1xf32>
    tpu.vector_store %arg6[%c0_21, %c0_22], %47 {strides = array<i32>} : memref<1x1xf32, #tpu.memory_space<vmem>>, vector<1x1xf32>,
    %c0_i32_23 = arith.constant 0 : i32
    %49 = arith.cmpi eq, %arg0, %c0_i32_23 : i32
    %50 = arith.extui %49 : i1 to i32
    %c0_i32_24 = arith.constant 0 : i32
    %51 = arith.cmpi ne, %50, %c0_i32_24 : i32
    scf.if %51 {
      %c0_25 = arith.constant 0 : index
      %c0_26 = arith.constant 0 : index
      %52 = vector.load %arg6[%c0_25, %c0_26] : memref<1x1xf32, #tpu.memory_space<vmem>>, vector<1x1xf32>
      %cst_27 = arith.constant -6.250000e-02 : f32
      %53 = vector.broadcast %cst_27 : f32 to vector<1x1xf32>
      %54 = arith.mulf %53, %52 : vector<1x1xf32>
      %c0_28 = arith.constant 0 : index
      %c0_29 = arith.constant 0 : index
      %55 = vector.load %arg5[%c0_28, %c0_29] : memref<1x1xf32, #tpu.memory_space<vmem>>, vector<1x1xf32>
      tpu.vector_store %arg5[%c0_28, %c0_29], %54 {strides = array<i32>} : memref<1x1xf32, #tpu.memory_space<vmem>>, vector<1x1xf32>,
    } else {
    }
    return
  }
  func.func @transform_0(%arg0: i32) -> (i32, i32) {
    %c0_i32 = arith.constant 0 : i32
    %c0_i32_0 = arith.constant 0 : i32
    return %arg0, %c0_i32 : i32, i32
  }
  func.func @transform_1(%arg0: i32) -> (i32, i32) {
    %c0_i32 = arith.constant 0 : i32
    %c0_i32_0 = arith.constant 0 : i32
    return %arg0, %c0_i32 : i32, i32
  }
  func.func @transform_2(%arg0: i32) -> (i32, i32) {
    %c0_i32 = arith.constant 0 : i32
    %c0_i32_0 = arith.constant 0 : i32
    return %arg0, %c0_i32 : i32, i32
  }
  func.func @transform_3(%arg0: i32) -> (i32, i32) {
    %c0_i32 = arith.constant 0 : i32
    %c0_i32_0 = arith.constant 0 : i32
    return %arg0, %c0_i32 : i32, i32
  }
  func.func @transform_4(%arg0: i32) -> (i32, i32) {
    %c0_i32 = arith.constant 0 : i32
    %c0_i32_0 = arith.constant 0 : i32
    %c0_i32_1 = arith.constant 0 : i32
    return %c0_i32, %c0_i32_0 : i32, i32
  }
}

</mosaic_0001>

<llo_original>
// kernel: tpu_custom_call.1
$region0: #{tpu_custom_call.1}
  #allocation0 [shape = 'u32[]', space=smem, size = 0x4, offset = 0x4, fixed_abs, tag = 'smem constant byte address 0x4 - core index']
  #allocation1 [shape = 'u32[144,128]{1,0:T(1,128)}', space=vmem, size = 0x12000, scoped, tag = 'internal scratch']
  #allocation2 [shape = 'f32[1,1]{1,0:T(1,128)}', space=vmem, size = 0x200, scoped, tag = 'scratch operand']
  %s0 = inlined_call_operand.hbm [shape: f32[8,32], index: 0, kind: input, shape index: {}]
  %s1 = inlined_call_operand.hbm [shape: f32[8,32], index: 1, kind: input, shape index: {}]
  %s2 = inlined_call_operand.hbm [shape: f32[8,32], index: 2, kind: input, shape index: {}]
  %s3 = inlined_call_operand.vmem [shape: f32[8,32], index: 3, kind: input, shape index: {}]
  %s4 = inlined_call_operand.hbm [shape: f32[1,1], index: 4, kind: output, shape index: {}]
  %s5 = sld [smem:[#allocation0]]
  $region46: #{tpu_custom_call.1} parent=0
    _
  %s7 = ssub.s32 1, %s5
  %s8 = scalar_select 0, %s7, %s5
  $region1: #{tpu_custom_call.1} parent=0
    #allocation3 [shape = 'u8[4096]{0}', space=vmem, size = 0x1000, scoped, tag = 'input window, operand 0, single buffered']
    #allocation4 [shape = 's32[1]{0}', space=sflag, size = 0x4, scoped, tag = 'scoped memory for tpu_custom_call.1']
    #allocation5 [shape = 's32[1]{0}', space=sflag, size = 0x4, scoped, tag = 'scoped memory for tpu_custom_call.1']
    #allocation6 [shape = 'u8[4096]{0}', space=vmem, size = 0x1000, scoped, tag = 'input window, operand 1, single buffered']
    #allocation7 [shape = 's32[1]{0}', space=sflag, size = 0x4, scoped, tag = 'scoped memory for tpu_custom_call.1']
    #allocation8 [shape = 'u8[4096]{0}', space=vmem, size = 0x1000, scoped, tag = 'input window, operand 2, single buffered']
    #allocation9 [shape = 'u8[512]{0}', space=vmem, size = 0x400, scoped, tag = 'output window, operand 0, single buffered']
    %9 = vsyncpa [#allocation4], 0
    %10 = vsyncpa [#allocation7], 0
    %11 = vsyncpa [#allocation5], 0
    // Predicated region
    $region2: #{tpu_custom_call.1} parent=1 // pred_check
      _
    $region3: #{tpu_custom_call.1} parent=1 // pred_check_branch
      %13 = sbr.rel (0) target = $region5
    $region4: #{tpu_custom_call.1} parent=1 // pred_region
      %s15 = ssub.s32 128, 128
      %16 = vsyncadd [#allocation4], %s15
      %s18 = sshll.u32 [#allocation3], 4
      %s19 = int_to_ptr.vmem [resolvable:$true] %s18
      %21 = dma.hbm_to_vmem [thread:$0]  %s0, 128, %s19, [#allocation4]
    $region5: #{tpu_custom_call.1} parent=1 // pred_fallthru
      _
    // Predicated region
    $region6: #{tpu_custom_call.1} parent=1 // pred_check
      _
    $region7: #{tpu_custom_call.1} parent=1 // pred_check_branch
      %23 = sbr.rel (0) target = $region9
    $region8: #{tpu_custom_call.1} parent=1 // pred_region
      %s25 = ssub.s32 128, 128
      %26 = vsyncadd [#allocation7], %s25
      %s28 = sshll.u32 [#allocation6], 4
      %s29 = int_to_ptr.vmem [resolvable:$true] %s28
      %31 = dma.hbm_to_vmem [thread:$0]  %s1, 128, %s29, [#allocation7]
    $region9: #{tpu_custom_call.1} parent=1 // pred_fallthru
      _
    // Predicated region
    $region10: #{tpu_custom_call.1} parent=1 // pred_check
      _
    $region11: #{tpu_custom_call.1} parent=1 // pred_check_branch
      %33 = sbr.rel (0) target = $region13
    $region12: #{tpu_custom_call.1} parent=1 // pred_region
      %s35 = ssub.s32 128, 128
      %36 = vsyncadd [#allocation7], %s35
      %s38 = sshll.u32 [#allocation8], 4
      %s39 = int_to_ptr.vmem [resolvable:$true] %s38
      %41 = dma.hbm_to_vmem [thread:$0]  %s2, 128, %s39, [#allocation7]
    $region13: #{tpu_custom_call.1} parent=1 // pred_fallthru
      _
    // Predicated region
    $region14: #{tpu_custom_call.1} parent=1 // pred_check
      _
    $region15: #{tpu_custom_call.1} parent=1 // pred_check_branch
      %43 = sbr.rel (0) target = $region17
    $region16: #{tpu_custom_call.1} parent=1 // pred_region
      _
    $region17: #{tpu_custom_call.1} parent=1 // pred_fallthru
      _
    // Predicated region
    $region18: #{tpu_custom_call.1} parent=1 // pred_check
      _
    $region19: #{tpu_custom_call.1} parent=1 // pred_check_branch
      %45 = sbr.rel (0) target = $region21
    $region20: #{tpu_custom_call.1} parent=1 // pred_region
      %46 = dma.done [#allocation4], 128
    $region21: #{tpu_custom_call.1} parent=1 // pred_fallthru
      _
    // Predicated region
    $region22: #{tpu_custom_call.1} parent=1 // pred_check
      _
    $region23: #{tpu_custom_call.1} parent=1 // pred_check_branch
      %48 = sbr.rel (0) target = $region25
    $region24: #{tpu_custom_call.1} parent=1 // pred_region
      %49 = dma.done [#allocation7], 128
    $region25: #{tpu_custom_call.1} parent=1 // pred_fallthru
      _
    // Predicated region
    $region26: #{tpu_custom_call.1} parent=1 // pred_check
      _
    $region27: #{tpu_custom_call.1} parent=1 // pred_check_branch
      %51 = sbr.rel (0) target = $region29
    $region28: #{tpu_custom_call.1} parent=1 // pred_region
      %52 = dma.done [#allocation7], 128
    $region29: #{tpu_custom_call.1} parent=1 // pred_fallthru
      _
    %p53 = scmp.eq.s32.totalorder 0, 0
    // Predicated region
    $region30: #{tpu_custom_call.1} parent=1 // pred_check
      %p54 = pneg %p53
    $region31: #{tpu_custom_call.1} parent=1 // pred_check_branch
      %56 = sbr.rel (%p54) target = $region33
    $region32: #{tpu_custom_call.1} parent=1 // pred_region
      %vm57 = vcmask 0
      %58 = vst.msk [vmem:[#allocation2] sm:$0x1] %vm57, 0.0
    $region33: #{tpu_custom_call.1} parent=1 // pred_fallthru
      _
    %v59 = vld [vmem:[#allocation3] sm:$0xff]
    %v60 = vld [vmem:[#allocation6] sm:$0xff]
    %v61 = vld [vmem:[#allocation8] sm:$0xff]
    %v62 = vld [vmem:[%s3] sm:$0xff]
    %v63 = vld [vmem:[#allocation2] sm:$0x1]
    %v64 = vmul.f32 %v61, %v60
    %vm65 = vcmask 261120
    %v66 = vsel %vm65, %v64, 0.0
    %67 = vadd.xlane.f32.xlu0 %v66
    %v68 = vpop.xlane.xlu0 %67
    %v69 = vmul.f32 %v61, %v61
    %v70 = vsel %vm65, %v69, 0.0
    %71 = vadd.xlane.f32.xlu0 %v70
    %v72 = vpop.xlane.xlu0 %71
    %v73 = vmul.f32 %v60, %v60
    %v74 = vsel %vm65, %v73, 0.0
    %75 = vadd.xlane.f32.xlu0 %v74
    %v76 = vpop.xlane.xlu0 %75
    %v77 = vmax.f32 %v72, 1e-16
    %v78 = vrsqrt.pop %v77
    %v79 = vmax.f32 %v76, 1e-16
    %v80 = vrsqrt.pop %v79
    %v81 = vmul.f32 %v68, %v78
    %v82 = vmul.f32 %v81, %v80
    %v83 = vrot.slane %v82, 4
    %v84 = vadd.f32 %v82, %v83
    %v85 = vrot.slane %v84, 2
    %v86 = vadd.f32 %v84, %v85
    %v87 = vrot.slane %v86, 1
    %v88 = vadd.f32 %v86, %v87
    %v89 = vmul.f32 %v62, %v59
    %v90 = vsel %vm65, %v89, 0.0
    %91 = vadd.xlane.f32.xlu0 %v90
    %v92 = vpop.xlane.xlu0 %91
    %v93 = vmul.f32 %v62, %v62
    %v94 = vsel %vm65, %v93, 0.0
    %95 = vadd.xlane.f32.xlu0 %v94
    %v96 = vpop.xlane.xlu0 %95
    %v97 = vmul.f32 %v59, %v59
    %v98 = vsel %vm65, %v97, 0.0
    %99 = vadd.xlane.f32.xlu0 %v98
    %v100 = vpop.xlane.xlu0 %99
    %v101 = vmax.f32 %v96, 1e-16
    %v102 = vrsqrt.pop %v101
    %v103 = vmax.f32 %v100, 1e-16
    %v104 = vrsqrt.pop %v103
    %v105 = vmul.f32 %v92, %v102
    %v106 = vmul.f32 %v105, %v104
    %v107 = vrot.slane %v106, 4
    %v108 = vadd.f32 %v106, %v107
    %v109 = vrot.slane %v108, 2
    %v110 = vadd.f32 %v108, %v109
    %v111 = vrot.slane %v110, 1
    %v112 = vadd.f32 %v110, %v111
    %v113 = vadd.f32 %v88, %v112
    %v114 = vadd.f32 %v63, %v113
    %vm115 = vcmask 0
    %116 = vst.msk [vmem:[#allocation2] sm:$0x1] %vm115, %v114
    // Predicated region
    $region34: #{tpu_custom_call.1} parent=1 // pred_check
      %p117 = pneg %p53
    $region35: #{tpu_custom_call.1} parent=1 // pred_check_branch
      %119 = sbr.rel (%p117) target = $region37
    $region36: #{tpu_custom_call.1} parent=1 // pred_region
      %v120 = vld [vmem:[#allocation2] sm:$0x1]
      %v121 = vmul.f32 %v120, -0.0625
      %122 = vst.msk [vmem:[#allocation9] sm:$0x1] %vm115, %v121
    $region37: #{tpu_custom_call.1} parent=1 // pred_fallthru
      _
    // Predicated region
    $region38: #{tpu_custom_call.1} parent=1 // pred_check
      _
    $region39: #{tpu_custom_call.1} parent=1 // pred_check_branch
      %124 = sbr.rel (0) target = $region41
    $region40: #{tpu_custom_call.1} parent=1 // pred_region
      %s126 = ssub.s32 16, 16
      %127 = vsyncadd [#allocation5], %s126
      %s129 = sshll.u32 [#allocation9], 4
      %s130 = int_to_ptr.vmem [resolvable:$true] %s129
      %132 = dma.vmem_to_hbm [thread:$0]  %s130, 16, %s4, [#allocation5]
    $region41: #{tpu_custom_call.1} parent=1 // pred_fallthru
      _
    // Predicated region
    $region42: #{tpu_custom_call.1} parent=1 // pred_check
      _
    $region43: #{tpu_custom_call.1} parent=1 // pred_check_branch
      %134 = sbr.rel (0) target = $region45
    $region44: #{tpu_custom_call.1} parent=1 // pred_region
      %135 = dma.done [#allocation5], 16
    $region45: #{tpu_custom_call.1} parent=1 // pred_fallthru
      _
    %136 = vsyncpa [#allocation4], 1
    %137 = vsyncpa [#allocation7], 1
    %138 = vsyncpa [#allocation5], 1

</llo_original>
